<compile_context>
chip_gen: v5e
topology: v5e:2x2
jax: 0.10.0
libtpu: 0.0.40
codegen_flags: <defaults>
</compile_context>

<pallas_src>
import math
import functools

import jax
import jax.numpy as jnp
from jax.experimental import pallas as pl
from jax.experimental.pallas import tpu as pltpu


def _round_up(x, m):
    return ((x + m - 1) // m) * m


def _mlp_kernel(x_ref,
                w1_ref, b1_ref,
                w2_ref, b2_ref,
                w3_ref, b3_ref,
                w4_ref, b4_ref,
                o_ref):
    w1 = w1_ref[...]
    cdt = w1.dtype  # MXU operand dtype (bf16 or f32); accumulation is f32.

    # Layer 1: Linear + ReLU
    h = jnp.dot(x_ref[...].astype(cdt), w1, preferred_element_type=jnp.float32)
    h = jnp.maximum(h + b1_ref[...], 0.0)
    # Layer 2: Linear + ReLU
    h = jnp.dot(h.astype(cdt), w2_ref[...], preferred_element_type=jnp.float32)
    h = jnp.maximum(h + b2_ref[...], 0.0)
    # Layer 3: Linear + ReLU
    h = jnp.dot(h.astype(cdt), w3_ref[...], preferred_element_type=jnp.float32)
    h = jnp.maximum(h + b3_ref[...], 0.0)
    # Layer 4: Linear (true 1-wide output column) + Sigmoid, f32 elementwise.
    h = jnp.dot(h.astype(cdt), w4_ref[...], preferred_element_type=jnp.float32)
    o_ref[...] = jax.nn.sigmoid(h + b4_ref[...])


def prepare_nn_params(params, compute_dtype=jnp.bfloat16):
    """Pad/cast parameters ONCE, outside the per-call hot path.

    params: list of 4 (W[in,out], b[out]) pairs (W transposed vs PyTorch).
    Returns flat tuple (w1,b1,...,w4,b4) with:
      - hidden feature dims zero-padded to multiples of 128,
      - layer 1 keeping its true input-row count (x streamed unpadded),
      - layer 4 keeping its true 1-wide output column,
      - weights cast to `compute_dtype` (MXU operands), biases kept f32.
    """
    n = len(params)
    prepared = []
    for li, (w, b) in enumerate(params):
        in_d, out_d = w.shape
        rows = in_d if li == 0 else _round_up(in_d, 128)
        cols = out_d if li == n - 1 else _round_up(out_d, 128)
        wp = jnp.pad(w.astype(jnp.float32), ((0, rows - in_d), (0, cols - out_d)))
        bp = jnp.pad(b.astype(jnp.float32)[None, :], ((0, 0), (0, cols - out_d)))
        prepared += [wp.astype(compute_dtype), bp]
    return tuple(prepared)


@functools.partial(jax.jit, static_argnames=("batch_tile",))
def nn_forward_pallas(x, prepared, batch_tile=256):
    """x: [B, in_dim]. prepared: output of prepare_nn_params. Returns [B, 1] f32."""
    w1, b1, w2, b2, w3, b3, w4, b4 = prepared
    B, in_dim = x.shape
    assert w1.shape[0] == in_dim, (w1.shape, in_dim)

    # Batch tile: multiple of 8 (f32 sublane), capped at `batch_tile`, and no
    # larger than needed for small batches (toy B=8 -> single 8-row tile).
    bt = min(batch_tile, _round_up(B, 8))
    bt = max(8, (bt // 8) * 8)
    Bp = _round_up(B, bt)

    x = x.astype(jnp.float32)
    if Bp != B:
        x = jnp.pad(x, ((0, Bp - B), (0, 0)))

    grid = (Bp // bt,)

    def const_map(i):
        return (0, 0)

    # x block uses the TRUE in_dim as its full last dim (no 128-lane pad copy).
    in_specs = [pl.BlockSpec((bt, in_dim), lambda i: (i, 0))]
    # Weights/biases: full-array, grid-invariant blocks (stay resident in VMEM;
    # ~0.1 MiB total here so double-buffering them is negligible).
    for arr in (w1, b1, w2, b2, w3, b3, w4, b4):
        in_specs.append(pl.BlockSpec(arr.shape, const_map))

    out_spec = pl.BlockSpec((bt, 1), lambda i: (i, 0))

    out = pl.pallas_call(
        _mlp_kernel,
        out_shape=jax.ShapeDtypeStruct((Bp, 1), jnp.float32),
        grid_spec=pltpu.PrefetchScalarGridSpec(
            num_scalar_prefetch=0,
            grid=grid,
            in_specs=in_specs,
            out_specs=out_spec,
        ),
        compiler_params=pltpu.CompilerParams(
            dimension_semantics=("parallel",)),
    )(x, *prepared)

    return out[:B]


def init_nn_params(key, in_dim, h_dim):
    """Deterministic init mirroring NN.__init__ layer shapes (weights stored [in,out])."""
    mid_dim = int(math.sqrt(h_dim * in_dim))
    q1_dim = int(math.sqrt(h_dim * mid_dim))
    q3_dim = int(math.sqrt(mid_dim * in_dim))
    layer_dims = [(in_dim, q3_dim), (q3_dim, mid_dim), (mid_dim, q1_dim), (q1_dim, 1)]

    params = []
    for (fan_in, fan_out) in layer_dims:
        key, kw, kb = jax.random.split(key, 3)
        bound = 1.0 / math.sqrt(fan_in)  # same range as PyTorch default Linear init
        w = jax.random.uniform(kw, (fan_in, fan_out), jnp.float32, -bound, bound)
        b = jax.random.uniform(kb, (fan_out,), jnp.float32, -bound, bound)
        params.append((w, b))
    return params


def nn_forward_reference(x, params):
    h = x
    for i, (w, b) in enumerate(params):
        h = h @ w + b
        h = jax.nn.sigmoid(h) if i == len(params) - 1 else jnp.maximum(h, 0.0)
    return h


if __name__ == "__main__":
    # Small shapes consistent with the module: NN(in_dim=64, h_dim=32)
    in_dim, h_dim = 64, 32
    batch = 8

    key = jax.random.PRNGKey(0)
    kx, kp, kx2 = jax.random.split(key, 3)
    x = jax.random.normal(kx, (batch, in_dim), jnp.float32)
    params = init_nn_params(kp, in_dim, h_dim)
    ref = nn_forward_reference(x, params)

    # 1) f32 MXU operands: exact match with the f32 reference.
    prep_f32 = prepare_nn_params(params, compute_dtype=jnp.float32)
    out_f32 = jax.block_until_ready(nn_forward_pallas(x, prep_f32))
    assert out_f32.shape == (batch, 1), out_f32.shape
    assert jnp.allclose(out_f32, ref, atol=1e-5, rtol=1e-5), (
        float(jnp.max(jnp.abs(out_f32 - ref))))

    # 2) bf16 MXU operands (recommended on v5e/v6e/v7x), f32 accumulation and
    #    f32 bias/ReLU/sigmoid -> small quantization error vs f32 reference.
    prep_bf16 = prepare_nn_params(params, compute_dtype=jnp.bfloat16)
    out_bf16 = jax.block_until_ready(nn_forward_pallas(x, prep_bf16))
    assert out_bf16.shape == (batch, 1), out_bf16.shape
    assert jnp.allclose(out_bf16, ref, atol=2e-2, rtol=0.0), (
        float(jnp.max(jnp.abs(out_bf16 - ref))))

    # 3) Larger batch exercising the multi-tile grid + row padding path.
    batch_big = 300
    x_big = jax.random.normal(kx2, (batch_big, in_dim), jnp.float32)
    ref_big = nn_forward_reference(x_big, params)
    out_big = jax.block_until_ready(nn_forward_pallas(x_big, prep_f32))
    assert out_big.shape == (batch_big, 1), out_big.shape
    assert jnp.allclose(out_big, ref_big, atol=1e-5, rtol=1e-5), (
        float(jnp.max(jnp.abs(out_big - ref_big))))

    print("KERNEL_OK")
</pallas_src>

<mosaic_0001>
module attributes {stable_mosaic.version = 11 : i64} {
  func.func @_mlp_kernel(%arg0: i32, %arg1: memref<8x64xf32, #tpu.memory_space<vmem>>, %arg2: memref<64x128xf32, #tpu.memory_space<vmem>>, %arg3: memref<1x128xf32, #tpu.memory_space<vmem>>, %arg4: memref<128x128xf32, #tpu.memory_space<vmem>>, %arg5: memref<1x128xf32, #tpu.memory_space<vmem>>, %arg6: memref<128x128xf32, #tpu.memory_space<vmem>>, %arg7: memref<1x128xf32, #tpu.memory_space<vmem>>, %arg8: memref<128x1xf32, #tpu.memory_space<vmem>>, %arg9: memref<1x1xf32, #tpu.memory_space<vmem>>, %arg10: memref<8x1xf32, #tpu.memory_space<vmem>>) attributes {dimension_semantics = [#tpu.dimension_semantics<parallel>], iteration_bounds = array<i64: 1>, scalar_prefetch = 0 : i64, scratch_operands = 0 : i64, tpu.core_type = #tpu.core_type<tc>, window_params = [{transform_indices = @transform_0, window_bounds = array<i64: 8, 64>}, {pipeline_mode = #tpu.pipeline_mode<synchronous>, transform_indices = @transform_1, window_bounds = array<i64: 64, 128>}, {pipeline_mode = #tpu.pipeline_mode<synchronous>, transform_indices = @transform_2, window_bounds = array<i64: 1, 128>}, {pipeline_mode = #tpu.pipeline_mode<synchronous>, transform_indices = @transform_3, window_bounds = array<i64: 128, 128>}, {pipeline_mode = #tpu.pipeline_mode<synchronous>, transform_indices = @transform_4, window_bounds = array<i64: 1, 128>}, {pipeline_mode = #tpu.pipeline_mode<synchronous>, transform_indices = @transform_5, window_bounds = array<i64: 128, 128>}, {pipeline_mode = #tpu.pipeline_mode<synchronous>, transform_indices = @transform_6, window_bounds = array<i64: 1, 128>}, {pipeline_mode = #tpu.pipeline_mode<synchronous>, transform_indices = @transform_7, window_bounds = array<i64: 128, 1>}, {pipeline_mode = #tpu.pipeline_mode<synchronous>, transform_indices = @transform_8, window_bounds = array<i64: 1, 1>}, {transform_indices = @transform_9, window_bounds = array<i64: 8, 1>}]} {
    %c0 = arith.constant 0 : index
    %c0_0 = arith.constant 0 : index
    %0 = vector.load %arg2[%c0, %c0_0] : memref<64x128xf32, #tpu.memory_space<vmem>>, vector<64x128xf32>
    %c0_1 = arith.constant 0 : index
    %c0_2 = arith.constant 0 : index
    %1 = vector.load %arg1[%c0_1, %c0_2] : memref<8x64xf32, #tpu.memory_space<vmem>>, vector<8x64xf32>
    %cst = arith.constant dense<0.000000e+00> : vector<8x128xf32>
    %2 = tpu.matmul %1, %0, %cst {dimension_numbers = #tpu.dot_dimension_numbers<[1], [0], [0], [1], [0, 0, 1, 1], [], []>} : vector<8x64xf32>, vector<64x128xf32>, vector<8x128xf32> -> vector<8x128xf32>
    %c0_3 = arith.constant 0 : index
    %c0_4 = arith.constant 0 : index
    %3 = vector.load %arg3[%c0_3, %c0_4] : memref<1x128xf32, #tpu.memory_space<vmem>>, vector<1x128xf32>
    %4 = vector.broadcast %3 : vector<1x128xf32> to vector<8x128xf32>
    %5 = arith.addf %2, %4 : vector<8x128xf32>
    %cst_5 = arith.constant 0.000000e+00 : f32
    %6 = vector.broadcast %cst_5 : f32 to vector<8x128xf32>
    %7 = arith.maximumf %5, %6 : vector<8x128xf32>
    %c0_6 = arith.constant 0 : index
    %c0_7 = arith.constant 0 : index
    %8 = vector.load %arg4[%c0_6, %c0_7] : memref<128x128xf32, #tpu.memory_space<vmem>>, vector<128x128xf32>
    %cst_8 = arith.constant dense<0.000000e+00> : vector<8x128xf32>
    %9 = tpu.matmul %7, %8, %cst_8 {dimension_numbers = #tpu.dot_dimension_numbers<[1], [0], [0], [1], [0, 0, 1, 1], [], []>} : vector<8x128xf32>, vector<128x128xf32>, vector<8x128xf32> -> vector<8x128xf32>
    %c0_9 = arith.constant 0 : index
    %c0_10 = arith.constant 0 : index
    %10 = vector.load %arg5[%c0_9, %c0_10] : memref<1x128xf32, #tpu.memory_space<vmem>>, vector<1x128xf32>
    %11 = vector.broadcast %10 : vector<1x128xf32> to vector<8x128xf32>
    %12 = arith.addf %9, %11 : vector<8x128xf32>
    %cst_11 = arith.constant 0.000000e+00 : f32
    %13 = vector.broadcast %cst_11 : f32 to vector<8x128xf32>
    %14 = arith.maximumf %12, %13 : vector<8x128xf32>
    %c0_12 = arith.constant 0 : index
    %c0_13 = arith.constant 0 : index
    %15 = vector.load %arg6[%c0_12, %c0_13] : memref<128x128xf32, #tpu.memory_space<vmem>>, vector<128x128xf32>
    %cst_14 = arith.constant dense<0.000000e+00> : vector<8x128xf32>
    %16 = tpu.matmul %14, %15, %cst_14 {dimension_numbers = #tpu.dot_dimension_numbers<[1], [0], [0], [1], [0, 0, 1, 1], [], []>} : vector<8x128xf32>, vector<128x128xf32>, vector<8x128xf32> -> vector<8x128xf32>
    %c0_15 = arith.constant 0 : index
    %c0_16 = arith.constant 0 : index
    %17 = vector.load %arg7[%c0_15, %c0_16] : memref<1x128xf32, #tpu.memory_space<vmem>>, vector<1x128xf32>
    %18 = vector.broadcast %17 : vector<1x128xf32> to vector<8x128xf32>
    %19 = arith.addf %16, %18 : vector<8x128xf32>
    %cst_17 = arith.constant 0.000000e+00 : f32
    %20 = vector.broadcast %cst_17 : f32 to vector<8x128xf32>
    %21 = arith.maximumf %19, %20 : vector<8x128xf32>
    %c0_18 = arith.constant 0 : index
    %c0_19 = arith.constant 0 : index
    %22 = vector.load %arg8[%c0_18, %c0_19] : memref<128x1xf32, #tpu.memory_space<vmem>>, vector<128x1xf32>
    %cst_20 = arith.constant dense<0.000000e+00> : vector<8x1xf32>
    %23 = tpu.matmul %21, %22, %cst_20 {dimension_numbers = #tpu.dot_dimension_numbers<[1], [0], [0], [1], [0, 0, 1, 1], [], []>} : vector<8x128xf32>, vector<128x1xf32>, vector<8x1xf32> -> vector<8x1xf32>
    %c0_21 = arith.constant 0 : index
    %c0_22 = arith.constant 0 : index
    %24 = vector.load %arg9[%c0_21, %c0_22] : memref<1x1xf32, #tpu.memory_space<vmem>>, vector<1x1xf32>
    %25 = vector.broadcast %24 : vector<1x1xf32> to vector<8x1xf32>
    %26 = arith.addf %23, %25 : vector<8x1xf32>
    %27 = arith.negf %26 : vector<8x1xf32>
    %28 = math.exp %27 : vector<8x1xf32>
    %cst_23 = arith.constant 1.000000e+00 : f32
    %29 = vector.broadcast %cst_23 : f32 to vector<8x1xf32>
    %30 = arith.addf %29, %28 : vector<8x1xf32>
    %31 = arith.divf %29, %30 : vector<8x1xf32>
    %c0_24 = arith.constant 0 : index
    %c0_25 = arith.constant 0 : index
    %32 = vector.load %arg10[%c0_24, %c0_25] : memref<8x1xf32, #tpu.memory_space<vmem>>, vector<8x1xf32>
    tpu.vector_store %arg10[%c0_24, %c0_25], %31 {strides = array<i32>} : memref<8x1xf32, #tpu.memory_space<vmem>>, vector<8x1xf32>,
    return
  }
  func.func @transform_0(%arg0: i32) -> (i32, i32) {
    %c0_i32 = arith.constant 0 : i32
    %c0_i32_0 = arith.constant 0 : i32
    return %arg0, %c0_i32 : i32, i32
  }
  func.func @transform_1(%arg0: i32) -> (i32, i32) {
    %c0_i32 = arith.constant 0 : i32
    %c0_i32_0 = arith.constant 0 : i32
    %c0_i32_1 = arith.constant 0 : i32
    return %c0_i32, %c0_i32_0 : i32, i32
  }
  func.func @transform_2(%arg0: i32) -> (i32, i32) {
    %c0_i32 = arith.constant 0 : i32
    %c0_i32_0 = arith.constant 0 : i32
    %c0_i32_1 = arith.constant 0 : i32
    return %c0_i32, %c0_i32_0 : i32, i32
  }
  func.func @transform_3(%arg0: i32) -> (i32, i32) {
    %c0_i32 = arith.constant 0 : i32
    %c0_i32_0 = arith.constant 0 : i32
    %c0_i32_1 = arith.constant 0 : i32
    return %c0_i32, %c0_i32_0 : i32, i32
  }
  func.func @transform_4(%arg0: i32) -> (i32, i32) {
    %c0_i32 = arith.constant 0 : i32
    %c0_i32_0 = arith.constant 0 : i32
    %c0_i32_1 = arith.constant 0 : i32
    return %c0_i32, %c0_i32_0 : i32, i32
  }
  func.func @transform_5(%arg0: i32) -> (i32, i32) {
    %c0_i32 = arith.constant 0 : i32
    %c0_i32_0 = arith.constant 0 : i32
    %c0_i32_1 = arith.constant 0 : i32
    return %c0_i32, %c0_i32_0 : i32, i32
  }
  func.func @transform_6(%arg0: i32) -> (i32, i32) {
    %c0_i32 = arith.constant 0 : i32
    %c0_i32_0 = arith.constant 0 : i32
    %c0_i32_1 = arith.constant 0 : i32
    return %c0_i32, %c0_i32_0 : i32, i32
  }
  func.func @transform_7(%arg0: i32) -> (i32, i32) {
    %c0_i32 = arith.constant 0 : i32
    %c0_i32_0 = arith.constant 0 : i32
    %c0_i32_1 = arith.constant 0 : i32
    return %c0_i32, %c0_i32_0 : i32, i32
  }
  func.func @transform_8(%arg0: i32) -> (i32, i32) {
    %c0_i32 = arith.constant 0 : i32
    %c0_i32_0 = arith.constant 0 : i32
    %c0_i32_1 = arith.constant 0 : i32
    return %c0_i32, %c0_i32_0 : i32, i32
  }
  func.func @transform_9(%arg0: i32) -> (i32, i32) {
    %c0_i32 = arith.constant 0 : i32
    %c0_i32_0 = arith.constant 0 : i32
    return %arg0, %c0_i32 : i32, i32
  }
}

</mosaic_0001>

<llo_original>
// kernel: nn_forward_pallas.1
$region0: #{nn_forward_pallas.1}
  #allocation0 [shape = 'u32[]', space=smem, size = 0x4, offset = 0x4, fixed_abs, tag = 'smem constant byte address 0x4 - core index']
  #allocation1 [shape = 'u32[72,128]{1,0:T(1,128)}', space=vmem, size = 0x9000, scoped, tag = 'internal scratch']
  #allocation2 [shape = 'f32[1,1]{1,0:T(1,128)S(1)}', space=vmem, size = 0x200, scoped, tag = 'scoped memory for nn_forward_pallas.1']
  %s0 = inlined_call_operand.hbm [shape: f32[8,64], index: 0, kind: input, shape index: {}]
  %s1 = inlined_call_operand.hbm [shape: f32[64,128], index: 1, kind: input, shape index: {}]
  %s2 = inlined_call_operand.vmem [shape: f32[1,128], index: 2, kind: input, shape index: {}]
  %s3 = inlined_call_operand.vmem [shape: f32[128,128], index: 3, kind: input, shape index: {}]
  %s4 = inlined_call_operand.vmem [shape: f32[1,128], index: 4, kind: input, shape index: {}]
  %s5 = inlined_call_operand.hbm [shape: f32[128,128], index: 5, kind: input, shape index: {}]
  %s6 = inlined_call_operand.vmem [shape: f32[1,128], index: 6, kind: input, shape index: {}]
  %s7 = inlined_call_operand.vmem [shape: f32[128,1], index: 7, kind: input, shape index: {}]
  %s8 = inlined_call_operand.<no memory space> [shape: f32[1,1], index: 8, kind: input, shape index: {}]
  %s9 = inlined_call_operand.vmem [shape: f32[8,1], index: 9, kind: output, shape index: {}]
  %s10 = sld [smem:[#allocation0]]
  $region58: #{nn_forward_pallas.1} parent=0
    _
  %s12 = ssub.s32 1, %s10
  %s13 = scalar_select 0, %s12, %s10
  %v14 = vstv %s8
  %15 = vst [vmem:[#allocation2] sm:$0x1] %v14
  $region1: #{nn_forward_pallas.1} parent=0
    #allocation3 [shape = 'u8[4096]{0}', space=vmem, size = 0x1000, scoped, tag = 'input window, operand 0, single buffered']
    #allocation4 [shape = 's32[1]{0}', space=sflag, size = 0x4, scoped, tag = 'scoped memory for nn_forward_pallas.1']
    #allocation5 [shape = 'u8[32768]{0}', space=vmem, size = 0x8000, scoped, tag = 'input window, operand 1, single buffered']
    #allocation6 [shape = 's32[1]{0}', space=sflag, size = 0x4, scoped, tag = 'scoped memory for nn_forward_pallas.1']
    #allocation7 [shape = 'u8[65536]{0}', space=vmem, size = 0x10000, scoped, tag = 'input window, operand 5, single buffered']
    %16 = vsyncpa [#allocation4], 0
    %17 = vsyncpa [#allocation6], 0
    // Predicated region
    $region2: #{nn_forward_pallas.1} parent=1 // pred_check
      _
    $region3: #{nn_forward_pallas.1} parent=1 // pred_check_branch
      %19 = sbr.rel (0) target = $region5
    $region4: #{nn_forward_pallas.1} parent=1 // pred_region
      %21 = vsyncadd [#allocation4], 0
      %s23 = sshll.u32 %s0, 4
      %s24 = int_to_ptr.hbm [resolvable:$true] %s23
      %s25 = sshll.u32 [#allocation3], 4
      %s26 = int_to_ptr.vmem [resolvable:$true] %s25
      %28 = dma.hbm_to_vmem [thread:$0]  %s24, 128, %s26, [#allocation4]
    $region5: #{nn_forward_pallas.1} parent=1 // pred_fallthru
      _
    // Predicated region
    $region6: #{nn_forward_pallas.1} parent=1 // pred_check
      _
    $region7: #{nn_forward_pallas.1} parent=1 // pred_check_branch
      %30 = sbr.rel (0) target = $region9
    $region8: #{nn_forward_pallas.1} parent=1 // pred_region
      %32 = vsyncadd [#allocation6], 0
      %s33 = sshll.u32 %s1, 4
      %s34 = int_to_ptr.hbm [resolvable:$true] %s33
      %s35 = sshll.u32 [#allocation5], 4
      %s36 = int_to_ptr.vmem [resolvable:$true] %s35
      %41 = dma.hbm_to_vmem [thread:$0]  %s34, 1024, %s36, [#allocation6], 128, 128, 8
    $region9: #{nn_forward_pallas.1} parent=1 // pred_fallthru
      _
    // Predicated region
    $region10: #{nn_forward_pallas.1} parent=1 // pred_check
      _
    $region11: #{nn_forward_pallas.1} parent=1 // pred_check_branch
      %43 = sbr.rel (0) target = $region13
    $region12: #{nn_forward_pallas.1} parent=1 // pred_region
      _
    $region13: #{nn_forward_pallas.1} parent=1 // pred_fallthru
      _
    // Predicated region
    $region14: #{nn_forward_pallas.1} parent=1 // pred_check
      _
    $region15: #{nn_forward_pallas.1} parent=1 // pred_check_branch
      %45 = sbr.rel (0) target = $region17
    $region16: #{nn_forward_pallas.1} parent=1 // pred_region
      _
    $region17: #{nn_forward_pallas.1} parent=1 // pred_fallthru
      _
    // Predicated region
    $region18: #{nn_forward_pallas.1} parent=1 // pred_check
      _
    $region19: #{nn_forward_pallas.1} parent=1 // pred_check_branch
      %47 = sbr.rel (0) target = $region21
    $region20: #{nn_forward_pallas.1} parent=1 // pred_region
      _
    $region21: #{nn_forward_pallas.1} parent=1 // pred_fallthru
      _
    // Predicated region
    $region22: #{nn_forward_pallas.1} parent=1 // pred_check
      _
    $region23: #{nn_forward_pallas.1} parent=1 // pred_check_branch
      %49 = sbr.rel (0) target = $region25
    $region24: #{nn_forward_pallas.1} parent=1 // pred_region
      %51 = vsyncadd [#allocation6], 0
      %s52 = sshll.u32 %s5, 4
      %s53 = int_to_ptr.hbm [resolvable:$true] %s52
      %s54 = sshll.u32 [#allocation7], 4
      %s55 = int_to_ptr.vmem [resolvable:$true] %s54
      %60 = dma.hbm_to_vmem [thread:$0]  %s53, 2048, %s55, [#allocation6], 128, 128, 8
    $region25: #{nn_forward_pallas.1} parent=1 // pred_fallthru
      _
    // Predicated region
    $region26: #{nn_forward_pallas.1} parent=1 // pred_check
      _
    $region27: #{nn_forward_pallas.1} parent=1 // pred_check_branch
      %62 = sbr.rel (0) target = $region29
    $region28: #{nn_forward_pallas.1} parent=1 // pred_region
      _
    $region29: #{nn_forward_pallas.1} parent=1 // pred_fallthru
      _
    // Predicated region
    $region30: #{nn_forward_pallas.1} parent=1 // pred_check
      _
    $region31: #{nn_forward_pallas.1} parent=1 // pred_check_branch
      %64 = sbr.rel (0) target = $region33
    $region32: #{nn_forward_pallas.1} parent=1 // pred_region
      _
    $region33: #{nn_forward_pallas.1} parent=1 // pred_fallthru
      _
    // Predicated region
    $region34: #{nn_forward_pallas.1} parent=1 // pred_check
      _
    $region35: #{nn_forward_pallas.1} parent=1 // pred_check_branch
      %66 = sbr.rel (0) target = $region37
    $region36: #{nn_forward_pallas.1} parent=1 // pred_region
      _
    $region37: #{nn_forward_pallas.1} parent=1 // pred_fallthru
      _
    // Predicated region
    $region38: #{nn_forward_pallas.1} parent=1 // pred_check
      _
    $region39: #{nn_forward_pallas.1} parent=1 // pred_check_branch
      %68 = sbr.rel (0) target = $region41
    $region40: #{nn_forward_pallas.1} parent=1 // pred_region
      %70 = dma.done [#allocation4], 128
    $region41: #{nn_forward_pallas.1} parent=1 // pred_fallthru
      _
    // Predicated region
    $region42: #{nn_forward_pallas.1} parent=1 // pred_check
      _
    $region43: #{nn_forward_pallas.1} parent=1 // pred_check_branch
      %72 = sbr.rel (0) target = $region45
    $region44: #{nn_forward_pallas.1} parent=1 // pred_region
      %74 = dma.done [#allocation6], 1024
    $region45: #{nn_forward_pallas.1} parent=1 // pred_fallthru
      _
    // Predicated region
    $region46: #{nn_forward_pallas.1} parent=1 // pred_check
      _
    $region47: #{nn_forward_pallas.1} parent=1 // pred_check_branch
      %76 = sbr.rel (0) target = $region49
    $region48: #{nn_forward_pallas.1} parent=1 // pred_region
      %78 = dma.done [#allocation6], 2048
    $region49: #{nn_forward_pallas.1} parent=1 // pred_fallthru
      _
    %v79 = vld [vmem:[#allocation5] sm:$0xff]
    %v80 = vld [vmem:[#allocation5 + $0x8] sm:$0xff]
    %v81 = vld [vmem:[#allocation5 + $0x10] sm:$0xff]
    %v82 = vld [vmem:[#allocation5 + $0x18] sm:$0xff]
    %v83 = vld [vmem:[#allocation5 + $0x20] sm:$0xff]
    %v84 = vld [vmem:[#allocation5 + $0x28] sm:$0xff]
    %v85 = vld [vmem:[#allocation5 + $0x30] sm:$0xff]
    %v86 = vld [vmem:[#allocation5 + $0x38] sm:$0xff]
    %v87 = vld [vmem:[#allocation3] sm:$0xff]
    %v88 = vld [vmem:[%s2] sm:$0x1]
    %v90 = vperm.slane %v88, 0
    %vm92 = vcmask 523264
    %v94 = vsel %vm92, %v87, 0
    %96 = vmatpush.msra.mxu0 0.0
    %97 = vmatpush.msra.mxu0 0.0
    %98 = vmatpush.msra.mxu0 0.0
    %99 = vmatpush.msra.mxu0 0.0
    %100 = vmatpush.msra.mxu0 0.0
    %101 = vmatpush.msra.mxu0 0.0
    %102 = vmatpush.msra.mxu0 0.0
    %103 = vmatpush.msra.mxu0 0.0
    %104 = vmatpush.msra.mxu0 %v86
    %105 = vmatpush.msra.mxu0 %v85
    %106 = vmatpush.msra.mxu0 %v84
    %107 = vmatpush.msra.mxu0 %v83
    %108 = vmatpush.msra.mxu0 %v82
    %109 = vmatpush.msra.mxu0 %v81
    %110 = vmatpush.msra.mxu0 %v80
    %111 = vmatpush.msra.mxu0 %v79
    %112 = vmatmul.f32.gmra.mxu0 %v94
    %v113 = vpop.f32.mrf.mxu0
    %v114 = vadd.f32 %v90, %v113
    %115 = vdwg.mxu0
    %v116 = vmax.f32 %v114, 0.0
    %v117 = vld [vmem:[%s3] sm:$0xff]
    %v118 = vld [vmem:[%s3 + $0x8] sm:$0xff]
    %v119 = vld [vmem:[%s3 + $0x10] sm:$0xff]
    %v120 = vld [vmem:[%s3 + $0x18] sm:$0xff]
    %v121 = vld [vmem:[%s3 + $0x20] sm:$0xff]
    %v122 = vld [vmem:[%s3 + $0x28] sm:$0xff]
    %v123 = vld [vmem:[%s3 + $0x30] sm:$0xff]
    %v124 = vld [vmem:[%s3 + $0x38] sm:$0xff]
    %v125 = vld [vmem:[%s3 + $0x40] sm:$0xff]
    %v126 = vld [vmem:[%s3 + $0x48] sm:$0xff]
    %v127 = vld [vmem:[%s3 + $0x50] sm:$0xff]
    %v128 = vld [vmem:[%s3 + $0x58] sm:$0xff]
    %v129 = vld [vmem:[%s3 + $0x60] sm:$0xff]
    %v130 = vld [vmem:[%s3 + $0x68] sm:$0xff]
    %v131 = vld [vmem:[%s3 + $0x70] sm:$0xff]
    %v132 = vld [vmem:[%s3 + $0x78] sm:$0xff]
    %v133 = vld [vmem:[%s4] sm:$0x1]
    %v135 = vperm.slane %v133, 0
    %137 = vmatpush.msra.mxu0 %v132
    %138 = vmatpush.msra.mxu0 %v131
    %139 = vmatpush.msra.mxu0 %v130
    %140 = vmatpush.msra.mxu0 %v129
    %141 = vmatpush.msra.mxu0 %v128
    %142 = vmatpush.msra.mxu0 %v127
    %143 = vmatpush.msra.mxu0 %v126
    %144 = vmatpush.msra.mxu0 %v125
    %145 = vmatpush.msra.mxu0 %v124
    %146 = vmatpush.msra.mxu0 %v123
    %147 = vmatpush.msra.mxu0 %v122
    %148 = vmatpush.msra.mxu0 %v121
    %149 = vmatpush.msra.mxu0 %v120
    %150 = vmatpush.msra.mxu0 %v119
    %151 = vmatpush.msra.mxu0 %v118
    %152 = vmatpush.msra.mxu0 %v117
    %153 = vmatmul.f32.gmra.mxu0 %v116
    %v154 = vpop.f32.mrf.mxu0
    %v155 = vadd.f32 %v135, %v154
    %156 = vdwg.mxu0
    %v157 = vmax.f32 %v155, 0.0
    %v158 = vld [vmem:[#allocation7] sm:$0xff]
    %v159 = vld [vmem:[#allocation7 + $0x8] sm:$0xff]
    %v160 = vld [vmem:[#allocation7 + $0x10] sm:$0xff]
    %v161 = vld [vmem:[#allocation7 + $0x18] sm:$0xff]
    %v162 = vld [vmem:[#allocation7 + $0x20] sm:$0xff]
    %v163 = vld [vmem:[#allocation7 + $0x28] sm:$0xff]
    %v164 = vld [vmem:[#allocation7 + $0x30] sm:$0xff]
    %v165 = vld [vmem:[#allocation7 + $0x38] sm:$0xff]
    %v166 = vld [vmem:[#allocation7 + $0x40] sm:$0xff]
    %v167 = vld [vmem:[#allocation7 + $0x48] sm:$0xff]
    %v168 = vld [vmem:[#allocation7 + $0x50] sm:$0xff]
    %v169 = vld [vmem:[#allocation7 + $0x58] sm:$0xff]
    %v170 = vld [vmem:[#allocation7 + $0x60] sm:$0xff]
    %v171 = vld [vmem:[#allocation7 + $0x68] sm:$0xff]
    %v172 = vld [vmem:[#allocation7 + $0x70] sm:$0xff]
    %v173 = vld [vmem:[#allocation7 + $0x78] sm:$0xff]
    %v174 = vld [vmem:[%s6] sm:$0x1]
    %v176 = vperm.slane %v174, 0
    %178 = vmatpush.msra.mxu0 %v173
    %179 = vmatpush.msra.mxu0 %v172
    %180 = vmatpush.msra.mxu0 %v171
    %181 = vmatpush.msra.mxu0 %v170
    %182 = vmatpush.msra.mxu0 %v169
    %183 = vmatpush.msra.mxu0 %v168
    %184 = vmatpush.msra.mxu0 %v167
    %185 = vmatpush.msra.mxu0 %v166
    %186 = vmatpush.msra.mxu0 %v165
    %187 = vmatpush.msra.mxu0 %v164
    %188 = vmatpush.msra.mxu0 %v163
    %189 = vmatpush.msra.mxu0 %v162
    %190 = vmatpush.msra.mxu0 %v161
    %191 = vmatpush.msra.mxu0 %v160
    %192 = vmatpush.msra.mxu0 %v159
    %193 = vmatpush.msra.mxu0 %v158
    %194 = vmatmul.f32.gmra.mxu0 %v157
    %v195 = vpop.f32.mrf.mxu0
    %v196 = vadd.f32 %v176, %v195
    %197 = vdwg.mxu0
    %v198 = vmax.f32 %v196, 0.0
    %v199 = vld [vmem:[%s7] sm:$0xff]
    %v200 = vld [vmem:[%s7 + $0x8] sm:$0xff]
    %v201 = vld [vmem:[%s7 + $0x10] sm:$0xff]
    %v202 = vld [vmem:[%s7 + $0x18] sm:$0xff]
    %v203 = vld [vmem:[%s7 + $0x20] sm:$0xff]
    %v204 = vld [vmem:[%s7 + $0x28] sm:$0xff]
    %v205 = vld [vmem:[%s7 + $0x30] sm:$0xff]
    %v206 = vld [vmem:[%s7 + $0x38] sm:$0xff]
    %v207 = vld [vmem:[%s7 + $0x40] sm:$0xff]
    %v208 = vld [vmem:[%s7 + $0x48] sm:$0xff]
    %v209 = vld [vmem:[%s7 + $0x50] sm:$0xff]
    %v210 = vld [vmem:[%s7 + $0x58] sm:$0xff]
    %v211 = vld [vmem:[%s7 + $0x60] sm:$0xff]
    %v212 = vld [vmem:[%s7 + $0x68] sm:$0xff]
    %v213 = vld [vmem:[%s7 + $0x70] sm:$0xff]
    %v214 = vld [vmem:[%s7 + $0x78] sm:$0xff]
    %v215 = vld [vmem:[#allocation2] sm:$0x1]
    %v217 = vperm.slane %v215, 0
    %219 = vmatpush.msra.mxu0 %v214
    %220 = vmatpush.msra.mxu0 %v213
    %221 = vmatpush.msra.mxu0 %v212
    %222 = vmatpush.msra.mxu0 %v211
    %223 = vmatpush.msra.mxu0 %v210
    %224 = vmatpush.msra.mxu0 %v209
    %225 = vmatpush.msra.mxu0 %v208
    %226 = vmatpush.msra.mxu0 %v207
    %227 = vmatpush.msra.mxu0 %v206
    %228 = vmatpush.msra.mxu0 %v205
    %229 = vmatpush.msra.mxu0 %v204
    %230 = vmatpush.msra.mxu0 %v203
    %231 = vmatpush.msra.mxu0 %v202
    %232 = vmatpush.msra.mxu0 %v201
    %233 = vmatpush.msra.mxu0 %v200
    %234 = vmatpush.msra.mxu0 %v199
    %235 = vmatmul.f32.gmra.mxu0 %v198
    %v236 = vpop.f32.mrf.mxu0
    %v237 = vadd.f32 %v217, %v236
    %238 = vdwg.mxu0
    %v239 = vxor.u32 %v237, 2147483648
    %v240 = vmul.f32 %v239, 1.442695
    %v241 = vpow.pop %v240
    %v242 = vadd.f32 %v241, 1.0
    %v243 = vrcp.pop %v242
    %v244 = vmul.f32 %v242, %v243
    %v245 = vsub.f32 1.0, %v244
    %v246 = vmul.f32 %v243, %v245
    %v247 = vadd.f32 %v243, %v246
    %vm248 = vweird.f32 %v242
    %vm249 = vweird.f32 %v243
    %vm250 = vmor %vm248, %vm249
    %v251 = vsel %vm250, %v243, %v247
    %v252 = vand.u32 2147483647, %v242
    %vm253 = vcmp.eq.f32.partialorder %v252, 8.507059e+37
    %v254 = vand.u32 %v242, 2147483648
    %v255 = vor.u32 1.1754944e-38, %v254
    %v256 = vsel %vm253, %v255, %v251
    %v257 = vmul.f32 1.0, %v256
    %vm258 = vcmask 7168
    %259 = vst.msk [vmem:[%s9] sm:$0xff] %vm258, %v257
    // Predicated region
    $region50: #{nn_forward_pallas.1} parent=1 // pred_check
      _
    $region51: #{nn_forward_pallas.1} parent=1 // pred_check_branch
      %261 = sbr.rel (0) target = $region53
    $region52: #{nn_forward_pallas.1} parent=1 // pred_region
      _
    $region53: #{nn_forward_pallas.1} parent=1 // pred_fallthru
      _
    // Predicated region
    $region54: #{nn_forward_pallas.1} parent=1 // pred_check
      _
    $region55: #{nn_forward_pallas.1} parent=1 // pred_check_branch
      %263 = sbr.rel (0) target = $region57
    $region56: #{nn_forward_pallas.1} parent=1 // pred_region
      _
    $region57: #{nn_forward_pallas.1} parent=1 // pred_fallthru
      _
    %264 = vsyncpa [#allocation4], 1
    %265 = vsyncpa [#allocation6], 1

</llo_original>
